<compile_context>
chip_gen: v5e
topology: v5e:2x2
jax: 0.10.0
libtpu: 0.0.40
codegen_flags: <defaults>
</compile_context>

<pallas_src>
import jax
import jax.numpy as jnp
from jax.experimental import pallas as pl
from jax.experimental.pallas import tpu as pltpu


def _copy_kernel(x_ref, o_ref):
    # Identity copy of one VMEM tile.
    o_ref[...] = x_ref[...]


def _infer_shape(total, shape):
    """Resolve a possible -1 in the target shape, like torch .view."""
    shape = list(shape)
    if -1 in shape:
        idx = shape.index(-1)
        known = 1
        for i, s in enumerate(shape):
            if i != idx:
                known *= int(s)
        assert known > 0 and total % known == 0, "view shape incompatible with input size"
        shape[idx] = total // known
    prod = 1
    for s in shape:
        prod *= int(s)
    assert prod == total, "view shape incompatible with input size"
    return tuple(int(s) for s in shape)


_LANES = 128
# ~4 MiB per block: in+out double-buffered = 16 MiB, under the explicit 32 MiB
# scoped-VMEM limit below (which itself fits every generation's physical VMEM).
_TARGET_BLOCK_BYTES = 4 * 1024 * 1024
_VMEM_LIMIT_BYTES = 32 * 1024 * 1024
# Only bother splitting a single-block copy into a 2-step grid (for v7x's two
# TensorCores) when the tensor is at least this big.
_MIN_SPLIT_BYTES = 1 * 1024 * 1024


def _sublane_multiple(dtype):
    # Native sublane tile: 8 for 32-bit, 16 for bf16, 32 for int8/fp8.
    itemsize = jnp.dtype(dtype).itemsize
    return max(8, 32 // itemsize)


def _round_down(v, m):
    return max(m, (v // m) * m)


def _round_up(v, m):
    return ((v + m - 1) // m) * m


def pallas_view(x, shape, *, materialize=False, alias_io=True):
    """Equivalent of torch x.view(*shape).

    Default: pure metadata reshape (zero HBM traffic), which is the honest TPU
    equivalent of a view.  With materialize=True, runs an HBM-bound Pallas
    identity-copy kernel over a lane-dense slab of the row-major data.
    """
    total = int(x.size)
    out_shape = _infer_shape(total, shape)

    if not materialize or total == 0:
        return jnp.reshape(x, out_shape)  # metadata-only, 0 bytes moved

    itemsize = jnp.dtype(x.dtype).itemsize
    sub = _sublane_multiple(x.dtype)
    nbytes = total * itemsize
    flat = jnp.reshape(x, (total,))  # metadata-only bitcast

    if total % _LANES == 0:
        # Fast path: lane-dense slab [rows, 128]; large row blocks; cdiv grid
        # so the ragged edge block is masked by Pallas (no pad, no slice).
        rows = total // _LANES
        block_rows = _round_down(_TARGET_BLOCK_BYTES // (_LANES * itemsize), sub)
        if rows <= block_rows:
            if nbytes >= _MIN_SPLIT_BYTES and rows >= 2 * sub:
                # Would collapse to grid=(1,): split 2-way so a 2-TC chip
                # (v7x) shards the copy; edge block (if any) is masked.
                block_rows = _round_up(pl.cdiv(rows, 2), sub)
                if block_rows >= rows:
                    block_rows = rows
            else:
                block_rows = rows  # single block == full array dims (legal)
        slab = jnp.reshape(flat, (rows, _LANES))
        block_shape = (block_rows, _LANES)
        grid = (pl.cdiv(rows, block_rows),)
        index_map = lambda i: (i, 0)
    elif total % sub == 0:
        # Sublane-aligned path: (sub, total//sub) keeps every vreg sublane
        # occupied (no 1/8-occupied vregs / padded DMAs); block along lanes.
        cols = total // sub
        block_cols = _round_down(_TARGET_BLOCK_BYTES // (sub * itemsize), _LANES)
        if cols <= block_cols:
            block_cols = cols  # single block == full array dims (legal)
        slab = jnp.reshape(flat, (sub, cols))
        block_shape = (sub, block_cols)
        grid = (pl.cdiv(cols, block_cols),)
        index_map = lambda i: (0, i)
    else:
        # Worst case (element count not a multiple of the sublane tile):
        # (1, N) slab.  Blocks are padded to `sub` sublanes in VMEM, so size
        # them by the PADDED footprint (sub*cols*itemsize ~= 4 MiB) to stay
        # well inside the scoped-VMEM limit on every generation.
        # TODO(synk): route the 128-aligned bulk through the fast path and only
        # the <128-element tail through this layout to regain full tiling.
        block_cols = _round_down(_TARGET_BLOCK_BYTES // (sub * itemsize), _LANES)
        if total <= block_cols:
            block_cols = total  # single block == full array dims (legal)
        slab = jnp.reshape(flat, (1, total))
        block_shape = (1, block_cols)
        grid = (pl.cdiv(total, block_cols),)
        index_map = lambda i: (0, i)

    out = pl.pallas_call(
        _copy_kernel,
        out_shape=jax.ShapeDtypeStruct(slab.shape, x.dtype),
        grid_spec=pltpu.PrefetchScalarGridSpec(
            num_scalar_prefetch=0,
            grid=grid,
            in_specs=[pl.BlockSpec(block_shape, index_map)],
            out_specs=pl.BlockSpec(block_shape, index_map),
        ),
        compiler_params=pltpu.CompilerParams(
            # TODO(synk): on v7x, pltpu.CORE_PARALLEL here shards the grid
            # across both TensorCores; plain "parallel" is kept because it is
            # valid on every generation (v5e/v6e have a single TC).
            dimension_semantics=("parallel",),
            vmem_limit_bytes=_VMEM_LIMIT_BYTES,
        ),
        # Pure bandwidth: tell XLA's scheduler this custom call moves 2N bytes.
        cost_estimate=pl.CostEstimate(
            flops=0, transcendentals=0, bytes_accessed=2 * total * itemsize),
        # Identity copy -> aliasing output onto input is bit-exact and matches
        # torch .view shared-storage semantics (avoids a second HBM buffer
        # whenever XLA can honor the alias).
        input_output_aliases={0: 0} if alias_io else {},
    )(slab)

    return jnp.reshape(out, out_shape)  # metadata-only bitcast


class View:
    """Mirror of the PyTorch module: View(shape)(x) == x.view(*shape)."""

    def __init__(self, shape):
        self.shape = tuple(shape)

    def __call__(self, x, *, materialize=False):
        return pallas_view(x, self.shape, materialize=materialize)


if __name__ == "__main__":
    key = jax.random.PRNGKey(0)

    # 1) NCHW activation (batch=2, channels=4, H=16, W=16) -> (2, -1), f32.
    x = jax.random.normal(key, (2, 4, 16, 16), dtype=jnp.float32)
    ref = jnp.reshape(x, (2, -1))
    view = View((2, -1))
    y = jax.block_until_ready(view(x, materialize=True))  # Pallas copy path
    assert y.shape == ref.shape and y.dtype == ref.dtype
    assert bool(jnp.all(y == ref))

    # Default (elided) path: pure metadata reshape, zero HBM traffic.
    y0 = jax.block_until_ready(view(x))
    assert y0.shape == ref.shape and bool(jnp.all(y0 == ref))

    # 2) bf16 (dtype-aware sublane multiple).
    xb = x.astype(jnp.bfloat16)
    refb = jnp.reshape(xb, (-1, 64))
    yb = jax.block_until_ready(pallas_view(xb, (-1, 64), materialize=True))
    assert yb.shape == refb.shape and yb.dtype == refb.dtype
    assert bool(jnp.all(yb == refb))

    # 3) 1 MiB f32 input: exercises the 2-way grid split (v7x 2-TC sharding).
    xs = jax.random.normal(jax.random.PRNGKey(1), (512, 512), dtype=jnp.float32)
    refs = jnp.reshape(xs, (256, 1024))
    ys = jax.block_until_ready(pallas_view(xs, (256, 1024), materialize=True))
    assert ys.shape == refs.shape and bool(jnp.all(ys == refs))

    # 4) Sublane-aligned but not lane-aligned element count (middle path).
    xm = jax.random.normal(jax.random.PRNGKey(2), (2, 4, 11), dtype=jnp.float32)
    refm = jnp.reshape(xm, (-1,))
    ym = jax.block_until_ready(pallas_view(xm, (-1,), materialize=True))
    assert ym.shape == refm.shape and bool(jnp.all(ym == refm))

    # 5) Fully ragged element count (worst-case (1, N) path).
    xr = jax.random.normal(jax.random.PRNGKey(3), (3, 5, 7), dtype=jnp.float32)
    refr = jnp.reshape(xr, (-1,))
    yr = jax.block_until_ready(pallas_view(xr, (-1,), materialize=True))
    assert yr.shape == refr.shape and bool(jnp.all(yr == refr))

    print("KERNEL_OK")
</pallas_src>

<mosaic_0001>
module attributes {stable_mosaic.version = 11 : i64} {
  func.func @_copy_kernel(%arg0: i32, %arg1: memref<16x128xf32, #tpu.memory_space<vmem>>, %arg2: memref<16x128xf32, #tpu.memory_space<vmem>>) attributes {dimension_semantics = [#tpu.dimension_semantics<parallel>], iteration_bounds = array<i64: 1>, scalar_prefetch = 0 : i64, scratch_operands = 0 : i64, tpu.core_type = #tpu.core_type<tc>, window_params = [{transform_indices = @transform_0, window_bounds = array<i64: 16, 128>}, {transform_indices = @transform_1, window_bounds = array<i64: 16, 128>}]} {
    %c0 = arith.constant 0 : index
    %c0_0 = arith.constant 0 : index
    %0 = vector.load %arg1[%c0, %c0_0] : memref<16x128xf32, #tpu.memory_space<vmem>>, vector<16x128xf32>
    %c0_1 = arith.constant 0 : index
    %c0_2 = arith.constant 0 : index
    %1 = vector.load %arg2[%c0_1, %c0_2] : memref<16x128xf32, #tpu.memory_space<vmem>>, vector<16x128xf32>
    tpu.vector_store %arg2[%c0_1, %c0_2], %0 {strides = array<i32>} : memref<16x128xf32, #tpu.memory_space<vmem>>, vector<16x128xf32>,
    return
  }
  func.func @transform_0(%arg0: i32) -> (i32, i32) {
    %c0_i32 = arith.constant 0 : i32
    %c0_i32_0 = arith.constant 0 : i32
    return %arg0, %c0_i32 : i32, i32
  }
  func.func @transform_1(%arg0: i32) -> (i32, i32) {
    %c0_i32 = arith.constant 0 : i32
    %c0_i32_0 = arith.constant 0 : i32
    return %arg0, %c0_i32 : i32, i32
  }
}

</mosaic_0001>

<llo_original>
// kernel: tpu_custom_call.1
$region0: #{tpu_custom_call.1}
  #allocation0 [shape = 'u32[]', space=smem, size = 0x4, offset = 0x4, fixed_abs, tag = 'smem constant byte address 0x4 - core index']
  #allocation1 [shape = 'u32[72,128]{1,0:T(1,128)}', space=vmem, size = 0x9000, scoped, tag = 'internal scratch']
  %s0 = inlined_call_operand.hbm [shape: f32[16,128], index: 0, kind: input, shape index: {}, may-alias: {0,1}]
  %s1 = inlined_call_operand.hbm [shape: f32[16,128], index: 1, kind: output, shape index: {}, may-alias: {0,1}]
  %s2 = sld [smem:[#allocation0]]
  $region18: #{tpu_custom_call.1} parent=0
    _
  %s4 = ssub.s32 1, %s2
  %s5 = scalar_select 0, %s4, %s2
  $region1: #{tpu_custom_call.1} parent=0
    #allocation2 [shape = 'u8[8192]{0}', space=vmem, size = 0x2000, scoped, tag = 'input window, operand 0, single buffered']
    #allocation3 [shape = 's32[1]{0}', space=sflag, size = 0x4, scoped, tag = 'scoped memory for tpu_custom_call.1']
    #allocation4 [shape = 's32[1]{0}', space=sflag, size = 0x4, scoped, tag = 'scoped memory for tpu_custom_call.1']
    #allocation5 [shape = 'u8[8192]{0}', space=vmem, size = 0x2000, scoped, tag = 'output window, operand 0, single buffered']
    %6 = vsyncpa [#allocation3], 0
    %7 = vsyncpa [#allocation4], 0
    // Predicated region
    $region2: #{tpu_custom_call.1} parent=1 // pred_check
      _
    $region3: #{tpu_custom_call.1} parent=1 // pred_check_branch
      %9 = sbr.rel (0) target = $region5
    $region4: #{tpu_custom_call.1} parent=1 // pred_region
      %11 = vsyncadd [#allocation3], 0
      %s12 = sshll.u32 %s0, 4
      %s13 = int_to_ptr.hbm [resolvable:$true] %s12
      %s14 = sshll.u32 [#allocation2], 4
      %s15 = int_to_ptr.vmem [resolvable:$true] %s14
      %20 = dma.hbm_to_vmem [thread:$0]  %s13, 256, %s15, [#allocation3], 128, 128, 8
    $region5: #{tpu_custom_call.1} parent=1 // pred_fallthru
      _
    // Predicated region
    $region6: #{tpu_custom_call.1} parent=1 // pred_check
      _
    $region7: #{tpu_custom_call.1} parent=1 // pred_check_branch
      %22 = sbr.rel (0) target = $region9
    $region8: #{tpu_custom_call.1} parent=1 // pred_region
      %24 = dma.done [#allocation3], 256
    $region9: #{tpu_custom_call.1} parent=1 // pred_fallthru
      _
    %v25 = vld [vmem:[#allocation2] sm:$0xff]
    %v26 = vld [vmem:[#allocation2 + $0x8] sm:$0xff]
    %27 = vst [vmem:[#allocation5] sm:$0xff] %v25
    %28 = vst [vmem:[#allocation5 + $0x8] sm:$0xff] %v26
    // Predicated region
    $region10: #{tpu_custom_call.1} parent=1 // pred_check
      _
    $region11: #{tpu_custom_call.1} parent=1 // pred_check_branch
      %30 = sbr.rel (0) target = $region13
    $region12: #{tpu_custom_call.1} parent=1 // pred_region
      %32 = vsyncadd [#allocation4], 0
      %s33 = sshll.u32 [#allocation5], 4
      %s34 = int_to_ptr.vmem [resolvable:$true] %s33
      %s35 = sshll.u32 %s1, 4
      %s36 = int_to_ptr.hbm [resolvable:$true] %s35
      %41 = dma.vmem_to_hbm [thread:$0]  %s34, 256, %s36, [#allocation4], 128, 128, 8
    $region13: #{tpu_custom_call.1} parent=1 // pred_fallthru
      _
    // Predicated region
    $region14: #{tpu_custom_call.1} parent=1 // pred_check
      _
    $region15: #{tpu_custom_call.1} parent=1 // pred_check_branch
      %43 = sbr.rel (0) target = $region17
    $region16: #{tpu_custom_call.1} parent=1 // pred_region
      %45 = dma.done [#allocation4], 256
    $region17: #{tpu_custom_call.1} parent=1 // pred_fallthru
      _
    %46 = vsyncpa [#allocation3], 1
    %47 = vsyncpa [#allocation4], 1

</llo_original>
